<compile_context>
chip_gen: v6e
topology: v6e:2x2x1
jax: 0.10.0
libtpu: 0.0.40
codegen_flags: <defaults>
</compile_context>

<pallas_src>
import functools

import jax
import jax.numpy as jnp
import numpy as np
from jax.experimental import pallas as pl
from jax.experimental.pallas import tpu as pltpu

EMBED_DIM = 32
HIDDEN_DIM = 64
NUM_LAYERS = 2
VOCAB = 133264
NUM_CLASSES = 2
GATES = 4 * HIDDEN_DIM  # fused gate width (256), layout [i | f | o | g]


def _lstm_act(gates, c_prev):
    """Fused LSTM nonlinearity. gates: (B, 4H) pre-activations in [i|f|o|g] order."""
    H = HIDDEN_DIM
    ifo = jax.nn.sigmoid(gates[:, :3 * H])   # single EUP pass for i, f, o
    g = jnp.tanh(gates[:, 3 * H:])
    i = ifo[:, :H]
    f = ifo[:, H:2 * H]
    o = ifo[:, 2 * H:]
    c_new = f * c_prev + i * g
    h_new = o * jnp.tanh(c_new)
    return h_new, c_new


def _lstm_kernel(t_total,
                 xg0_ref,                      # (Tc, B, 4H) precomputed x@Wih0 + b0 (time-major chunk)
                 whh0_ref,                     # (H, 4H) layer-0 recurrent weight
                 wih1_ref, whh1_ref, b1_ref,   # layer-1: (H,4H), (H,4H), (1,4H)
                 hout_ref,                     # (B, H) final top-layer hidden state
                 h0, c0, h1, c1):              # scratch: (B, H) each, carried across chunks
    chunk = pl.program_id(0)
    tc = xg0_ref.shape[0]
    base = chunk * tc

    @pl.when(chunk == 0)
    def _():
        # Wavefront prologue: layer-0 cell at global step 0 (initial states are zero,
        # so the h_prev @ Whh0 term vanishes); layer-1 state starts at zero.
        h0n, c0n = _lstm_act(xg0_ref[0], jnp.zeros(c0.shape, c0.dtype))
        h0[...] = h0n
        c0[...] = c0n
        h1[...] = jnp.zeros(h1.shape, h1.dtype)
        c1[...] = jnp.zeros(c1.shape, c1.dtype)

    # Valid timesteps in this chunk (last chunk may be zero-padded); chunk 0 starts at
    # local step 1 because step 0 of layer 0 was handled in the prologue.
    valid = jnp.minimum(tc, t_total - base)
    lo = jnp.where(chunk == 0, 1, 0)

    def body(lt, carry):
        h0c, c0c, h1c, c1c = carry
        # Wavefront: layer-1 cell at global step (base+lt-1) and layer-0 cell at
        # (base+lt) have no data dependence on each other inside this iteration, so
        # the scheduler can overlap their MXU pushes / EUP latency.
        g1 = (jnp.dot(h0c, wih1_ref[...], preferred_element_type=jnp.float32)
              + jnp.dot(h1c, whh1_ref[...], preferred_element_type=jnp.float32)
              + b1_ref[...])
        g0 = xg0_ref[lt] + jnp.dot(h0c, whh0_ref[...],
                                   preferred_element_type=jnp.float32)
        h1n, c1n = _lstm_act(g1, c1c)
        h0n, c0n = _lstm_act(g0, c0c)
        return h0n, c0n, h1n, c1n

    carry = (h0[...], c0[...], h1[...], c1[...])
    h0n, c0n, h1n, c1n = jax.lax.fori_loop(lo, valid, body, carry)
    h0[...] = h0n
    c0[...] = c0n
    h1[...] = h1n
    c1[...] = c1n

    @pl.when(chunk == pl.num_programs(0) - 1)
    def _():
        # Wavefront epilogue: final layer-1 cell at step T-1; its hidden state is the
        # classifier input (PyTorch `hidden[-1]`).
        g1 = (jnp.dot(h0[...], wih1_ref[...], preferred_element_type=jnp.float32)
              + jnp.dot(h1[...], whh1_ref[...], preferred_element_type=jnp.float32)
              + b1_ref[...])
        h1_fin, _ = _lstm_act(g1, c1[...])
        hout_ref[...] = h1_fin


def method_rnn_forward(x_ids, params, *, t_chunk=256):
    """x_ids: (B, T) int32 token ids. Returns (B, 2) float32 logits."""
    # Embedding gather stays in plain JAX (glue).
    emb = jnp.take(params["embedding"], x_ids, axis=0)            # (B, T, E)
    B, T, E = emb.shape
    H, G = HIDDEN_DIM, GATES

    # Hoist the layer-0 input projection out of the recurrence: one large lane-dense
    # GEMM over all timesteps, bias folded in.  Time-major so the kernel indexes the
    # leading (untiled) axis per step.
    xg0 = jnp.einsum("bte,eg->tbg", emb, params["wih0"]) + params["b0"]   # (T, B, 4H)

    tc = min(t_chunk, T)
    n_chunks = pl.cdiv(T, tc)
    t_pad = n_chunks * tc
    if t_pad != T:
        xg0 = jnp.pad(xg0, ((0, t_pad - T), (0, 0), (0, 0)))

    def whole(shape):
        return pl.BlockSpec(shape, lambda c: tuple(0 for _ in shape))

    h1_last = pl.pallas_call(
        functools.partial(_lstm_kernel, T),
        out_shape=jax.ShapeDtypeStruct((B, H), jnp.float32),
        grid_spec=pltpu.PrefetchScalarGridSpec(
            num_scalar_prefetch=0,
            grid=(n_chunks,),
            in_specs=[
                pl.BlockSpec((tc, B, G), lambda c: (c, 0, 0)),   # precomputed layer-0 gates
                whole((H, G)),                                   # whh0
                whole((H, G)),                                   # wih1
                whole((H, G)),                                   # whh1
                whole((1, G)),                                   # b1
            ],
            out_specs=pl.BlockSpec((B, H), lambda c: (0, 0)),
            scratch_shapes=[pltpu.VMEM((B, H), jnp.float32)] * 4,
        ),
        compiler_params=pltpu.CompilerParams(
            dimension_semantics=("arbitrary",)),
    )(xg0, params["whh0"], params["wih1"], params["whh1"], params["b1"])

    # Final (H, 2) Linear runs once; keep it in plain JAX (removes the only
    # non-lane-dense store from the kernel).
    return h1_last @ params["w_lin"] + params["b_lin"]


def init_params(key):
    """Deterministic parameter init matching the module's shapes.
    LSTM weights stored fused as (in, 4H) in [i|f|o|g] gate order; bias = b_ih + b_hh."""
    ks = jax.random.split(key, 9)
    H, E, G = HIDDEN_DIM, EMBED_DIM, GATES

    def u(k, shape, scale=0.1):
        return jax.random.uniform(k, shape, jnp.float32, -scale, scale)

    return {
        "embedding": u(ks[0], (VOCAB, E)),
        "wih0": u(ks[1], (E, G)),
        "whh0": u(ks[2], (H, G)),
        "b0":   u(ks[3], (1, G)),
        "wih1": u(ks[4], (H, G)),
        "whh1": u(ks[5], (H, G)),
        "b1":   u(ks[6], (1, G)),
        "w_lin": u(ks[7], (H, NUM_CLASSES)),
        "b_lin": u(ks[8], (1, NUM_CLASSES)),
    }


def reference_forward(x_ids, params):
    """Pure-JAX reference (lax.scan LSTM, same fused [i|f|o|g] weight layout)."""
    emb = jnp.take(params["embedding"], x_ids, axis=0)  # (B, T, E)
    B = emb.shape[0]
    H = HIDDEN_DIM

    def cell(x_in, h, c, wih, whh, b):
        z = x_in @ wih + h @ whh + b                 # (B, 4H)
        i = jax.nn.sigmoid(z[:, 0:H])
        f = jax.nn.sigmoid(z[:, H:2 * H])
        o = jax.nn.sigmoid(z[:, 2 * H:3 * H])
        g = jnp.tanh(z[:, 3 * H:])
        c_new = f * c + i * g
        return o * jnp.tanh(c_new), c_new

    def step(carry, x_t):
        h0, c0, h1, c1 = carry
        h0, c0 = cell(x_t, h0, c0, params["wih0"], params["whh0"], params["b0"])
        h1, c1 = cell(h0, h1, c1, params["wih1"], params["whh1"], params["b1"])
        return (h0, c0, h1, c1), None

    init = tuple(jnp.zeros((B, H), jnp.float32) for _ in range(4))
    (h0, c0, h1, c1), _ = jax.lax.scan(step, init, jnp.swapaxes(emb, 0, 1))
    return h1 @ params["w_lin"] + params["b_lin"]


if __name__ == "__main__":
    key = jax.random.PRNGKey(0)
    k_param, k_ids = jax.random.split(key)
    params = init_params(k_param)

    B, T = 2, 8
    x_ids = jax.random.randint(k_ids, (B, T), 0, VOCAB, dtype=jnp.int32)

    logits = jax.block_until_ready(method_rnn_forward(x_ids, params))
    ref = jax.block_until_ready(reference_forward(x_ids, params))
    np.testing.assert_allclose(np.asarray(logits), np.asarray(ref), rtol=1e-4, atol=1e-4)

    print("KERNEL_OK")
</pallas_src>

<mosaic_0001>
module attributes {stable_mosaic.version = 11 : i64} {
  func.func @_lstm_kernel(%arg0: i32, %arg1: memref<8x2x256xf32, #tpu.memory_space<vmem>>, %arg2: memref<64x256xf32, #tpu.memory_space<vmem>>, %arg3: memref<64x256xf32, #tpu.memory_space<vmem>>, %arg4: memref<64x256xf32, #tpu.memory_space<vmem>>, %arg5: memref<1x256xf32, #tpu.memory_space<vmem>>, %arg6: memref<2x64xf32, #tpu.memory_space<vmem>>, %arg7: memref<2x64xf32, #tpu.memory_space<vmem>>, %arg8: memref<2x64xf32, #tpu.memory_space<vmem>>, %arg9: memref<2x64xf32, #tpu.memory_space<vmem>>, %arg10: memref<2x64xf32, #tpu.memory_space<vmem>>) attributes {dimension_semantics = [#tpu.dimension_semantics<arbitrary>], iteration_bounds = array<i64: 1>, scalar_prefetch = 0 : i64, scratch_operands = 4 : i64, tpu.core_type = #tpu.core_type<tc>, window_params = [{transform_indices = @transform_0, window_bounds = array<i64: 8, 2, 256>}, {pipeline_mode = #tpu.pipeline_mode<synchronous>, transform_indices = @transform_1, window_bounds = array<i64: 64, 256>}, {pipeline_mode = #tpu.pipeline_mode<synchronous>, transform_indices = @transform_2, window_bounds = array<i64: 64, 256>}, {pipeline_mode = #tpu.pipeline_mode<synchronous>, transform_indices = @transform_3, window_bounds = array<i64: 64, 256>}, {pipeline_mode = #tpu.pipeline_mode<synchronous>, transform_indices = @transform_4, window_bounds = array<i64: 1, 256>}, {pipeline_mode = #tpu.pipeline_mode<synchronous>, transform_indices = @transform_5, window_bounds = array<i64: 2, 64>}]} {
    %c8_i32 = arith.constant 8 : i32
    %0 = arith.muli %arg0, %c8_i32 : i32
    %c0_i32 = arith.constant 0 : i32
    %1 = arith.cmpi eq, %arg0, %c0_i32 : i32
    %2 = arith.extui %1 : i1 to i32
    %c0_i32_0 = arith.constant 0 : i32
    %3 = arith.cmpi ne, %2, %c0_i32_0 : i32
    scf.if %3 {
      %c0_23 = arith.constant 0 : index
      %c0_24 = arith.constant 0 : index
      %c0_25 = arith.constant 0 : index
      %22 = vector.load %arg1[%c0_23, %c0_24, %c0_25] : memref<8x2x256xf32, #tpu.memory_space<vmem>>, vector<1x2x256xf32>
      %23 = vector.shape_cast %22 : vector<1x2x256xf32> to vector<2x256xf32>
      %cst = arith.constant 0.000000e+00 : f32
      %24 = vector.broadcast %cst : f32 to vector<2x64xf32>
      %25 = vector.extract_strided_slice %23 {offsets = [0, 0], sizes = [2, 192], strides = [1, 1]} : vector<2x256xf32> to vector<2x192xf32>
      %26 = arith.negf %25 : vector<2x192xf32>
      %27 = math.exp %26 : vector<2x192xf32>
      %cst_26 = arith.constant 1.000000e+00 : f32
      %28 = vector.broadcast %cst_26 : f32 to vector<2x192xf32>
      %29 = arith.addf %28, %27 : vector<2x192xf32>
      %30 = arith.divf %28, %29 : vector<2x192xf32>
      %31 = vector.extract_strided_slice %23 {offsets = [0, 192], sizes = [2, 64], strides = [1, 1]} : vector<2x256xf32> to vector<2x64xf32>
      %32 = math.tanh %31 : vector<2x64xf32>
      %33 = vector.extract_strided_slice %30 {offsets = [0, 0], sizes = [2, 64], strides = [1, 1]} : vector<2x192xf32> to vector<2x64xf32>
      %34 = vector.extract_strided_slice %30 {offsets = [0, 64], sizes = [2, 64], strides = [1, 1]} : vector<2x192xf32> to vector<2x64xf32>
      %35 = vector.extract_strided_slice %30 {offsets = [0, 128], sizes = [2, 64], strides = [1, 1]} : vector<2x192xf32> to vector<2x64xf32>
      %36 = arith.mulf %34, %24 : vector<2x64xf32>
      %37 = arith.mulf %33, %32 : vector<2x64xf32>
      %38 = arith.addf %36, %37 : vector<2x64xf32>
      %39 = math.tanh %38 : vector<2x64xf32>
      %40 = arith.mulf %35, %39 : vector<2x64xf32>
      %c0_27 = arith.constant 0 : index
      %c0_28 = arith.constant 0 : index
      %41 = vector.load %arg7[%c0_27, %c0_28] : memref<2x64xf32, #tpu.memory_space<vmem>>, vector<2x64xf32>
      tpu.vector_store %arg7[%c0_27, %c0_28], %40 {strides = array<i32>} : memref<2x64xf32, #tpu.memory_space<vmem>>, vector<2x64xf32>,
      %c0_29 = arith.constant 0 : index
      %c0_30 = arith.constant 0 : index
      %42 = vector.load %arg8[%c0_29, %c0_30] : memref<2x64xf32, #tpu.memory_space<vmem>>, vector<2x64xf32>
      tpu.vector_store %arg8[%c0_29, %c0_30], %38 {strides = array<i32>} : memref<2x64xf32, #tpu.memory_space<vmem>>, vector<2x64xf32>,
      %cst_31 = arith.constant 0.000000e+00 : f32
      %43 = vector.broadcast %cst_31 : f32 to vector<2x64xf32>
      %c0_32 = arith.constant 0 : index
      %c0_33 = arith.constant 0 : index
      %44 = vector.load %arg9[%c0_32, %c0_33] : memref<2x64xf32, #tpu.memory_space<vmem>>, vector<2x64xf32>
      tpu.vector_store %arg9[%c0_32, %c0_33], %43 {strides = array<i32>} : memref<2x64xf32, #tpu.memory_space<vmem>>, vector<2x64xf32>,
      %cst_34 = arith.constant 0.000000e+00 : f32
      %45 = vector.broadcast %cst_34 : f32 to vector<2x64xf32>
      %c0_35 = arith.constant 0 : index
      %c0_36 = arith.constant 0 : index
      %46 = vector.load %arg10[%c0_35, %c0_36] : memref<2x64xf32, #tpu.memory_space<vmem>>, vector<2x64xf32>
      tpu.vector_store %arg10[%c0_35, %c0_36], %45 {strides = array<i32>} : memref<2x64xf32, #tpu.memory_space<vmem>>, vector<2x64xf32>,
    } else {
    }
    %c8_i32_1 = arith.constant 8 : i32
    %4 = arith.subi %c8_i32_1, %0 : i32
    %c8_i32_2 = arith.constant 8 : i32
    %5 = arith.minsi %c8_i32_2, %4 : i32
    %c0_i32_3 = arith.constant 0 : i32
    %6 = arith.cmpi eq, %arg0, %c0_i32_3 : i32
    %c1_i32 = arith.constant 1 : i32
    %c0_i32_4 = arith.constant 0 : i32
    %7 = arith.select %6, %c1_i32, %c0_i32_4 : i32
    %c0 = arith.constant 0 : index
    %c0_5 = arith.constant 0 : index
    %8 = vector.load %arg7[%c0, %c0_5] : memref<2x64xf32, #tpu.memory_space<vmem>>, vector<2x64xf32>
    %c0_6 = arith.constant 0 : index
    %c0_7 = arith.constant 0 : index
    %9 = vector.load %arg8[%c0_6, %c0_7] : memref<2x64xf32, #tpu.memory_space<vmem>>, vector<2x64xf32>
    %c0_8 = arith.constant 0 : index
    %c0_9 = arith.constant 0 : index
    %10 = vector.load %arg9[%c0_8, %c0_9] : memref<2x64xf32, #tpu.memory_space<vmem>>, vector<2x64xf32>
    %c0_10 = arith.constant 0 : index
    %c0_11 = arith.constant 0 : index
    %11 = vector.load %arg10[%c0_10, %c0_11] : memref<2x64xf32, #tpu.memory_space<vmem>>, vector<2x64xf32>
    %12 = arith.subi %5, %7 : i32
    %13 = arith.addi %7, %12 : i32
    %c1_i32_12 = arith.constant 1 : i32
    %14:4 = scf.for %arg11 = %7 to %13 step %c1_i32_12 iter_args(%arg12 = %8, %arg13 = %9, %arg14 = %10, %arg15 = %11) -> (vector<2x64xf32>, vector<2x64xf32>, vector<2x64xf32>, vector<2x64xf32>)  : i32 {
      %c0_23 = arith.constant 0 : index
      %c0_24 = arith.constant 0 : index
      %22 = vector.load %arg3[%c0_23, %c0_24] : memref<64x256xf32, #tpu.memory_space<vmem>>, vector<64x256xf32>
      %cst = arith.constant dense<0.000000e+00> : vector<2x256xf32>
      %23 = tpu.matmul %arg12, %22, %cst {dimension_numbers = #tpu.dot_dimension_numbers<[1], [0], [0], [1], [0, 0, 1, 1], [], []>} : vector<2x64xf32>, vector<64x256xf32>, vector<2x256xf32> -> vector<2x256xf32>
      %c0_25 = arith.constant 0 : index
      %c0_26 = arith.constant 0 : index
      %24 = vector.load %arg4[%c0_25, %c0_26] : memref<64x256xf32, #tpu.memory_space<vmem>>, vector<64x256xf32>
      %cst_27 = arith.constant dense<0.000000e+00> : vector<2x256xf32>
      %25 = tpu.matmul %arg14, %24, %cst_27 {dimension_numbers = #tpu.dot_dimension_numbers<[1], [0], [0], [1], [0, 0, 1, 1], [], []>} : vector<2x64xf32>, vector<64x256xf32>, vector<2x256xf32> -> vector<2x256xf32>
      %26 = arith.addf %23, %25 : vector<2x256xf32>
      %c0_28 = arith.constant 0 : index
      %c0_29 = arith.constant 0 : index
      %27 = vector.load %arg5[%c0_28, %c0_29] : memref<1x256xf32, #tpu.memory_space<vmem>>, vector<1x256xf32>
      %28 = vector.broadcast %27 : vector<1x256xf32> to vector<2x256xf32>
      %29 = arith.addf %26, %28 : vector<2x256xf32>
      %30 = arith.index_cast %arg11 : i32 to index
      %c0_30 = arith.constant 0 : index
      %c0_31 = arith.constant 0 : index
      %31 = vector.load %arg1[%30, %c0_30, %c0_31] : memref<8x2x256xf32, #tpu.memory_space<vmem>>, vector<1x2x256xf32>
      %32 = vector.shape_cast %31 : vector<1x2x256xf32> to vector<2x256xf32>
      %c0_32 = arith.constant 0 : index
      %c0_33 = arith.constant 0 : index
      %33 = vector.load %arg2[%c0_32, %c0_33] : memref<64x256xf32, #tpu.memory_space<vmem>>, vector<64x256xf32>
      %cst_34 = arith.constant dense<0.000000e+00> : vector<2x256xf32>
      %34 = tpu.matmul %arg12, %33, %cst_34 {dimension_numbers = #tpu.dot_dimension_numbers<[1], [0], [0], [1], [0, 0, 1, 1], [], []>} : vector<2x64xf32>, vector<64x256xf32>, vector<2x256xf32> -> vector<2x256xf32>
      %35 = arith.addf %32, %34 : vector<2x256xf32>
      %36 = vector.extract_strided_slice %29 {offsets = [0, 0], sizes = [2, 192], strides = [1, 1]} : vector<2x256xf32> to vector<2x192xf32>
      %37 = arith.negf %36 : vector<2x192xf32>
      %38 = math.exp %37 : vector<2x192xf32>
      %cst_35 = arith.constant 1.000000e+00 : f32
      %39 = vector.broadcast %cst_35 : f32 to vector<2x192xf32>
      %40 = arith.addf %39, %38 : vector<2x192xf32>
      %41 = arith.divf %39, %40 : vector<2x192xf32>
      %42 = vector.extract_strided_slice %29 {offsets = [0, 192], sizes = [2, 64], strides = [1, 1]} : vector<2x256xf32> to vector<2x64xf32>
      %43 = math.tanh %42 : vector<2x64xf32>
      %44 = vector.extract_strided_slice %41 {offsets = [0, 0], sizes = [2, 64], strides = [1, 1]} : vector<2x192xf32> to vector<2x64xf32>
      %45 = vector.extract_strided_slice %41 {offsets = [0, 64], sizes = [2, 64], strides = [1, 1]} : vector<2x192xf32> to vector<2x64xf32>
      %46 = vector.extract_strided_slice %41 {offsets = [0, 128], sizes = [2, 64], strides = [1, 1]} : vector<2x192xf32> to vector<2x64xf32>
      %47 = arith.mulf %45, %arg15 : vector<2x64xf32>
      %48 = arith.mulf %44, %43 : vector<2x64xf32>
      %49 = arith.addf %47, %48 : vector<2x64xf32>
      %50 = math.tanh %49 : vector<2x64xf32>
      %51 = arith.mulf %46, %50 : vector<2x64xf32>
      %52 = vector.extract_strided_slice %35 {offsets = [0, 0], sizes = [2, 192], strides = [1, 1]} : vector<2x256xf32> to vector<2x192xf32>
      %53 = arith.negf %52 : vector<2x192xf32>
      %54 = math.exp %53 : vector<2x192xf32>
      %cst_36 = arith.constant 1.000000e+00 : f32
      %55 = vector.broadcast %cst_36 : f32 to vector<2x192xf32>
      %56 = arith.addf %55, %54 : vector<2x192xf32>
      %57 = arith.divf %55, %56 : vector<2x192xf32>
      %58 = vector.extract_strided_slice %35 {offsets = [0, 192], sizes = [2, 64], strides = [1, 1]} : vector<2x256xf32> to vector<2x64xf32>
      %59 = math.tanh %58 : vector<2x64xf32>
      %60 = vector.extract_strided_slice %57 {offsets = [0, 0], sizes = [2, 64], strides = [1, 1]} : vector<2x192xf32> to vector<2x64xf32>
      %61 = vector.extract_strided_slice %57 {offsets = [0, 64], sizes = [2, 64], strides = [1, 1]} : vector<2x192xf32> to vector<2x64xf32>
      %62 = vector.extract_strided_slice %57 {offsets = [0, 128], sizes = [2, 64], strides = [1, 1]} : vector<2x192xf32> to vector<2x64xf32>
      %63 = arith.mulf %61, %arg13 : vector<2x64xf32>
      %64 = arith.mulf %60, %59 : vector<2x64xf32>
      %65 = arith.addf %63, %64 : vector<2x64xf32>
      %66 = math.tanh %65 : vector<2x64xf32>
      %67 = arith.mulf %62, %66 : vector<2x64xf32>
      scf.yield %67, %65, %51, %49 : vector<2x64xf32>, vector<2x64xf32>, vector<2x64xf32>, vector<2x64xf32>
    }
    %c0_13 = arith.constant 0 : index
    %c0_14 = arith.constant 0 : index
    %15 = vector.load %arg7[%c0_13, %c0_14] : memref<2x64xf32, #tpu.memory_space<vmem>>, vector<2x64xf32>
    tpu.vector_store %arg7[%c0_13, %c0_14], %14#0 {strides = array<i32>} : memref<2x64xf32, #tpu.memory_space<vmem>>, vector<2x64xf32>,
    %c0_15 = arith.constant 0 : index
    %c0_16 = arith.constant 0 : index
    %16 = vector.load %arg8[%c0_15, %c0_16] : memref<2x64xf32, #tpu.memory_space<vmem>>, vector<2x64xf32>
    tpu.vector_store %arg8[%c0_15, %c0_16], %14#1 {strides = array<i32>} : memref<2x64xf32, #tpu.memory_space<vmem>>, vector<2x64xf32>,
    %c0_17 = arith.constant 0 : index
    %c0_18 = arith.constant 0 : index
    %17 = vector.load %arg9[%c0_17, %c0_18] : memref<2x64xf32, #tpu.memory_space<vmem>>, vector<2x64xf32>
    tpu.vector_store %arg9[%c0_17, %c0_18], %14#2 {strides = array<i32>} : memref<2x64xf32, #tpu.memory_space<vmem>>, vector<2x64xf32>,
    %c0_19 = arith.constant 0 : index
    %c0_20 = arith.constant 0 : index
    %18 = vector.load %arg10[%c0_19, %c0_20] : memref<2x64xf32, #tpu.memory_space<vmem>>, vector<2x64xf32>
    tpu.vector_store %arg10[%c0_19, %c0_20], %14#3 {strides = array<i32>} : memref<2x64xf32, #tpu.memory_space<vmem>>, vector<2x64xf32>,
    %c0_i32_21 = arith.constant 0 : i32
    %19 = arith.cmpi eq, %arg0, %c0_i32_21 : i32
    %20 = arith.extui %19 : i1 to i32
    %c0_i32_22 = arith.constant 0 : i32
    %21 = arith.cmpi ne, %20, %c0_i32_22 : i32
    scf.if %21 {
      %c0_23 = arith.constant 0 : index
      %c0_24 = arith.constant 0 : index
      %22 = vector.load %arg7[%c0_23, %c0_24] : memref<2x64xf32, #tpu.memory_space<vmem>>, vector<2x64xf32>
      %c0_25 = arith.constant 0 : index
      %c0_26 = arith.constant 0 : index
      %23 = vector.load %arg3[%c0_25, %c0_26] : memref<64x256xf32, #tpu.memory_space<vmem>>, vector<64x256xf32>
      %cst = arith.constant dense<0.000000e+00> : vector<2x256xf32>
      %24 = tpu.matmul %22, %23, %cst {dimension_numbers = #tpu.dot_dimension_numbers<[1], [0], [0], [1], [0, 0, 1, 1], [], []>} : vector<2x64xf32>, vector<64x256xf32>, vector<2x256xf32> -> vector<2x256xf32>
      %c0_27 = arith.constant 0 : index
      %c0_28 = arith.constant 0 : index
      %25 = vector.load %arg9[%c0_27, %c0_28] : memref<2x64xf32, #tpu.memory_space<vmem>>, vector<2x64xf32>
      %c0_29 = arith.constant 0 : index
      %c0_30 = arith.constant 0 : index
      %26 = vector.load %arg4[%c0_29, %c0_30] : memref<64x256xf32, #tpu.memory_space<vmem>>, vector<64x256xf32>
      %cst_31 = arith.constant dense<0.000000e+00> : vector<2x256xf32>
      %27 = tpu.matmul %25, %26, %cst_31 {dimension_numbers = #tpu.dot_dimension_numbers<[1], [0], [0], [1], [0, 0, 1, 1], [], []>} : vector<2x64xf32>, vector<64x256xf32>, vector<2x256xf32> -> vector<2x256xf32>
      %28 = arith.addf %24, %27 : vector<2x256xf32>
      %c0_32 = arith.constant 0 : index
      %c0_33 = arith.constant 0 : index
      %29 = vector.load %arg5[%c0_32, %c0_33] : memref<1x256xf32, #tpu.memory_space<vmem>>, vector<1x256xf32>
      %30 = vector.broadcast %29 : vector<1x256xf32> to vector<2x256xf32>
      %31 = arith.addf %28, %30 : vector<2x256xf32>
      %c0_34 = arith.constant 0 : index
      %c0_35 = arith.constant 0 : index
      %32 = vector.load %arg10[%c0_34, %c0_35] : memref<2x64xf32, #tpu.memory_space<vmem>>, vector<2x64xf32>
      %33 = vector.extract_strided_slice %31 {offsets = [0, 0], sizes = [2, 192], strides = [1, 1]} : vector<2x256xf32> to vector<2x192xf32>
      %34 = arith.negf %33 : vector<2x192xf32>
      %35 = math.exp %34 : vector<2x192xf32>
      %cst_36 = arith.constant 1.000000e+00 : f32
      %36 = vector.broadcast %cst_36 : f32 to vector<2x192xf32>
      %37 = arith.addf %36, %35 : vector<2x192xf32>
      %38 = arith.divf %36, %37 : vector<2x192xf32>
      %39 = vector.extract_strided_slice %31 {offsets = [0, 192], sizes = [2, 64], strides = [1, 1]} : vector<2x256xf32> to vector<2x64xf32>
      %40 = math.tanh %39 : vector<2x64xf32>
      %41 = vector.extract_strided_slice %38 {offsets = [0, 0], sizes = [2, 64], strides = [1, 1]} : vector<2x192xf32> to vector<2x64xf32>
      %42 = vector.extract_strided_slice %38 {offsets = [0, 64], sizes = [2, 64], strides = [1, 1]} : vector<2x192xf32> to vector<2x64xf32>
      %43 = vector.extract_strided_slice %38 {offsets = [0, 128], sizes = [2, 64], strides = [1, 1]} : vector<2x192xf32> to vector<2x64xf32>
      %44 = arith.mulf %42, %32 : vector<2x64xf32>
      %45 = arith.mulf %41, %40 : vector<2x64xf32>
      %46 = arith.addf %44, %45 : vector<2x64xf32>
      %47 = math.tanh %46 : vector<2x64xf32>
      %48 = arith.mulf %43, %47 : vector<2x64xf32>
      %c0_37 = arith.constant 0 : index
      %c0_38 = arith.constant 0 : index
      %49 = vector.load %arg6[%c0_37, %c0_38] : memref<2x64xf32, #tpu.memory_space<vmem>>, vector<2x64xf32>
      tpu.vector_store %arg6[%c0_37, %c0_38], %48 {strides = array<i32>} : memref<2x64xf32, #tpu.memory_space<vmem>>, vector<2x64xf32>,
    } else {
    }
    return
  }
  func.func @transform_0(%arg0: i32) -> (i32, i32, i32) {
    %c0_i32 = arith.constant 0 : i32
    %c0_i32_0 = arith.constant 0 : i32
    %c0_i32_1 = arith.constant 0 : i32
    return %arg0, %c0_i32, %c0_i32_0 : i32, i32, i32
  }
  func.func @transform_1(%arg0: i32) -> (i32, i32) {
    %c0_i32 = arith.constant 0 : i32
    %c0_i32_0 = arith.constant 0 : i32
    %c0_i32_1 = arith.constant 0 : i32
    return %c0_i32, %c0_i32_0 : i32, i32
  }
  func.func @transform_2(%arg0: i32) -> (i32, i32) {
    %c0_i32 = arith.constant 0 : i32
    %c0_i32_0 = arith.constant 0 : i32
    %c0_i32_1 = arith.constant 0 : i32
    return %c0_i32, %c0_i32_0 : i32, i32
  }
  func.func @transform_3(%arg0: i32) -> (i32, i32) {
    %c0_i32 = arith.constant 0 : i32
    %c0_i32_0 = arith.constant 0 : i32
    %c0_i32_1 = arith.constant 0 : i32
    return %c0_i32, %c0_i32_0 : i32, i32
  }
  func.func @transform_4(%arg0: i32) -> (i32, i32) {
    %c0_i32 = arith.constant 0 : i32
    %c0_i32_0 = arith.constant 0 : i32
    %c0_i32_1 = arith.constant 0 : i32
    return %c0_i32, %c0_i32_0 : i32, i32
  }
  func.func @transform_5(%arg0: i32) -> (i32, i32) {
    %c0_i32 = arith.constant 0 : i32
    %c0_i32_0 = arith.constant 0 : i32
    %c0_i32_1 = arith.constant 0 : i32
    return %c0_i32, %c0_i32_0 : i32, i32
  }
}

</mosaic_0001>

<llo_original>
// kernel: tpu_custom_call.1
$region0: #{tpu_custom_call.1}
  #allocation0 [shape = 'u32[]', space=smem, size = 0x4, offset = 0x4, fixed_abs, tag = 'smem constant byte address 0x4 - core index']
  #allocation1 [shape = 'u32[144,128]{1,0:T(1,128)}', space=vmem, size = 0x12000, scoped, tag = 'internal scratch']
  #allocation2 [shape = 'f32[2,64]{1,0:T(2,128)}', space=vmem, size = 0x400, scoped, tag = 'scratch operand']
  #allocation3 [shape = 'f32[2,64]{1,0:T(2,128)}', space=vmem, size = 0x400, scoped, tag = 'scratch operand']
  #allocation4 [shape = 'f32[2,64]{1,0:T(2,128)}', space=vmem, size = 0x400, scoped, tag = 'scratch operand']
  #allocation5 [shape = 'f32[2,64]{1,0:T(2,128)}', space=vmem, size = 0x400, scoped, tag = 'scratch operand']
  %s0 = inlined_call_operand.hbm [shape: f32[8,2,256], index: 0, kind: input, shape index: {}]
  %s1 = inlined_call_operand.hbm [shape: f32[64,256], index: 1, kind: input, shape index: {}]
  %s2 = inlined_call_operand.hbm [shape: f32[64,256], index: 2, kind: input, shape index: {}]
  %s3 = inlined_call_operand.hbm [shape: f32[64,256], index: 3, kind: input, shape index: {}]
  %s4 = inlined_call_operand.vmem [shape: f32[1,256], index: 4, kind: input, shape index: {}]
  %s5 = inlined_call_operand.hbm [shape: f32[2,64], index: 5, kind: output, shape index: {}]
  %s6 = sld [smem:[#allocation0]]
  $region61: #{tpu_custom_call.1} parent=0
    _
  %s8 = ssub.s32 1, %s6
  %s9 = scalar_select 0, %s8, %s6
  $region1: #{tpu_custom_call.1} parent=0
    #allocation6 [shape = 'u8[16384]{0}', space=vmem, size = 0x4000, scoped, tag = 'input window, operand 0, single buffered']
    #allocation7 [shape = 's32[1]{0}', space=sflag, size = 0x4, scoped, tag = 'scoped memory for tpu_custom_call.1']
    #allocation8 [shape = 's32[1]{0}', space=sflag, size = 0x4, scoped, tag = 'scoped memory for tpu_custom_call.1']
    #allocation9 [shape = 'u8[65536]{0}', space=vmem, size = 0x10000, scoped, tag = 'input window, operand 1, single buffered']
    #allocation10 [shape = 's32[1]{0}', space=sflag, size = 0x4, scoped, tag = 'scoped memory for tpu_custom_call.1']
    #allocation11 [shape = 'u8[65536]{0}', space=vmem, size = 0x10000, scoped, tag = 'input window, operand 2, single buffered']
    #allocation12 [shape = 'u8[65536]{0}', space=vmem, size = 0x10000, scoped, tag = 'input window, operand 3, single buffered']
    #allocation13 [shape = 's32[1]{0}', space=sflag, size = 0x4, scoped, tag = 'scoped memory for tpu_custom_call.1']
    #allocation14 [shape = 'u8[1024]{0}', space=vmem, size = 0x400, scoped, tag = 'output window, operand 0, single buffered']
    %10 = vsyncpa [#allocation7], 0
    %11 = vsyncpa [#allocation10], 0
    %12 = vsyncpa [#allocation13], 0
    %13 = vsyncpa [#allocation8], 0
    // Predicated region
    $region2: #{tpu_custom_call.1} parent=1 // pred_check
      _
    $region3: #{tpu_custom_call.1} parent=1 // pred_check_branch
      %15 = sbr.rel (0) target = $region5
    $region4: #{tpu_custom_call.1} parent=1 // pred_region
      %s17 = ssub.s32 512, 512
      %18 = vsyncadd [#allocation7], %s17
      %s19 = sshll.u32 [#allocation6], 4
      %s20 = int_to_ptr.vmem [resolvable:$true] %s19
      %25 = dma.hbm_to_vmem [thread:$0]  %s0, 512, %s20, [#allocation7], 64, 64, 4
    $region5: #{tpu_custom_call.1} parent=1 // pred_fallthru
      _
    // Predicated region
    $region6: #{tpu_custom_call.1} parent=1 // pred_check
      _
    $region7: #{tpu_custom_call.1} parent=1 // pred_check_branch
      %27 = sbr.rel (0) target = $region9
    $region8: #{tpu_custom_call.1} parent=1 // pred_region
      %s29 = ssub.s32 2048, 2048
      %30 = vsyncadd [#allocation10], %s29
      %s31 = sshll.u32 [#allocation9], 4
      %s32 = int_to_ptr.vmem [resolvable:$true] %s31
      %37 = dma.hbm_to_vmem [thread:$0]  %s1, 2048, %s32, [#allocation10], 256, 256, 16
    $region9: #{tpu_custom_call.1} parent=1 // pred_fallthru
      _
    // Predicated region
    $region10: #{tpu_custom_call.1} parent=1 // pred_check
      _
    $region11: #{tpu_custom_call.1} parent=1 // pred_check_branch
      %39 = sbr.rel (0) target = $region13
    $region12: #{tpu_custom_call.1} parent=1 // pred_region
      %s41 = ssub.s32 2048, 2048
      %42 = vsyncadd [#allocation10], %s41
      %s43 = sshll.u32 [#allocation11], 4
      %s44 = int_to_ptr.vmem [resolvable:$true] %s43
      %49 = dma.hbm_to_vmem [thread:$0]  %s2, 2048, %s44, [#allocation10], 256, 256, 16
    $region13: #{tpu_custom_call.1} parent=1 // pred_fallthru
      _
    // Predicated region
    $region14: #{tpu_custom_call.1} parent=1 // pred_check
      _
    $region15: #{tpu_custom_call.1} parent=1 // pred_check_branch
      %51 = sbr.rel (0) target = $region17
    $region16: #{tpu_custom_call.1} parent=1 // pred_region
      %s53 = ssub.s32 2048, 2048
      %54 = vsyncadd [#allocation13], %s53
      %s55 = sshll.u32 [#allocation12], 4
      %s56 = int_to_ptr.vmem [resolvable:$true] %s55
      %61 = dma.hbm_to_vmem [thread:$0]  %s3, 2048, %s56, [#allocation13], 256, 256, 16
    $region17: #{tpu_custom_call.1} parent=1 // pred_fallthru
      _
    // Predicated region
    $region18: #{tpu_custom_call.1} parent=1 // pred_check
      _
    $region19: #{tpu_custom_call.1} parent=1 // pred_check_branch
      %63 = sbr.rel (0) target = $region21
    $region20: #{tpu_custom_call.1} parent=1 // pred_region
      _
    $region21: #{tpu_custom_call.1} parent=1 // pred_fallthru
      _
    // Predicated region
    $region22: #{tpu_custom_call.1} parent=1 // pred_check
      _
    $region23: #{tpu_custom_call.1} parent=1 // pred_check_branch
      %65 = sbr.rel (0) target = $region25
    $region24: #{tpu_custom_call.1} parent=1 // pred_region
      %66 = dma.done [#allocation7], 512
    $region25: #{tpu_custom_call.1} parent=1 // pred_fallthru
      _
    // Predicated region
    $region26: #{tpu_custom_call.1} parent=1 // pred_check
      _
    $region27: #{tpu_custom_call.1} parent=1 // pred_check_branch
      %68 = sbr.rel (0) target = $region29
    $region28: #{tpu_custom_call.1} parent=1 // pred_region
      %69 = dma.done [#allocation10], 2048
    $region29: #{tpu_custom_call.1} parent=1 // pred_fallthru
      _
    // Predicated region
    $region30: #{tpu_custom_call.1} parent=1 // pred_check
      _
    $region31: #{tpu_custom_call.1} parent=1 // pred_check_branch
      %71 = sbr.rel (0) target = $region33
    $region32: #{tpu_custom_call.1} parent=1 // pred_region
      %72 = dma.done [#allocation10], 2048
    $region33: #{tpu_custom_call.1} parent=1 // pred_fallthru
      _
    // Predicated region
    $region34: #{tpu_custom_call.1} parent=1 // pred_check
      _
    $region35: #{tpu_custom_call.1} parent=1 // pred_check_branch
      %74 = sbr.rel (0) target = $region37
    $region36: #{tpu_custom_call.1} parent=1 // pred_region
      %75 = dma.done [#allocation13], 2048
    $region37: #{tpu_custom_call.1} parent=1 // pred_fallthru
      _
    %s76 = smul.u32 0, 8
    %p77 = scmp.eq.s32.totalorder 0, 0
    // Predicated region
    $region38: #{tpu_custom_call.1} parent=1 // pred_check
      %p78 = pneg %p77
    $region39: #{tpu_custom_call.1} parent=1 // pred_check_branch
      %80 = sbr.rel (%p78) target = $region41
    $region40: #{tpu_custom_call.1} parent=1 // pred_region
      %v81 = vld [vmem:[#allocation6] sm:$0xf]
      %v82 = vxor.u32 %v81, 2147483648
      %v83 = vmul.f32 %v82, 1.442695
      %v84 = vpow.pop %v83
      %v85 = vadd.f32 %v84, 1.0
      %v86 = vrcp.pop %v85
      %v87 = vmul.f32 1.0, %v86
      %89 = vrot.lane.b32.xlu0 %v81, 64
      %v90 = vpop.permute.xlu0 %89
      %v91 = vrot.slane %v90, 2
      %v93 = vtanh.pop %v91
      %v94 = vmul.f32 %v87, 0.0
      %v95 = vmul.f32 %v87, %v93
      %97 = vrot.lane.b32.xlu0 %v95, 64
      %v98 = vpop.permute.xlu0 %97
      %v100 = vadd.f32 %v94, %v98
      %v101 = vtanh.pop %v100
      %v103 = vrot.slane %v87, 2
      %106 = vrot.lane.b32.xlu0 %v101, 64
      %v107 = vpop.permute.xlu0 %106
      %v109 = vmul.f32 %v103, %v107
      %vm110 = vcmask 517120
      %111 = vst.msk [vmem:[#allocation2] sm:$0x3] %vm110, %v109
      %v114 = vunpack.c.l.s4 1983009808
      %v115 = vunpack.c.0.s8 %v114
      %v116 = vlaneseq
      %v117 = vshrl.u32 %v116, 7
      %v118 = vsub.s32 %v115, %v117
      %v119 = vrot.slane %v100, %v118
      %120 = vrot.lane.b32.xlu0 %v119, 64
      %v121 = vpop.permute.xlu0 %120
      %123 = vst.msk [vmem:[#allocation3] sm:$0x3] %vm110, %v121
      %124 = vst.msk [vmem:[#allocation4] sm:$0x3] %vm110, 0.0
      %125 = vst.msk [vmem:[#allocation5] sm:$0x3] %vm110, 0.0
    $region41: #{tpu_custom_call.1} parent=1 // pred_fallthru
      _
    %s126 = ssub.s32 8, %s76
    %p127 = scmp.lt.s32.totalorder %s126, 8
    %s128 = scalar_select %p127, %s126, 8
    %s129 = scalar_select %p77, 1, 0
    %v130 = vld [vmem:[#allocation2] sm:$0x3]
    %v131 = vld [vmem:[#allocation3] sm:$0x3]
    %v132 = vld [vmem:[#allocation4] sm:$0x3]
    %v133 = vld [vmem:[#allocation5] sm:$0x3]
    // While loop
    $region42: #{tpu_custom_call.1} parent=1 // loop_pre_header
      _
    $region43: #{tpu_custom_call.1} parent=1 // loop_header
      %s135 = sphi %s129, %s137
      %p136 = scmp.ge.s32.totalorder %s135, %s128
      %v140 = vphi %v130, %v514
      %v141 = vphi %v131, %v524
      %v142 = vphi %v132, %v475
      %v143 = vphi %v133, %v528
    $region44: #{tpu_custom_call.1} parent=1 // loop_header_branch
      %139 = sbr.rel (%p136) target = $region48
    $region45: #{tpu_custom_call.1} parent=1 // loop_body
      %v144 = vld [vmem:[#allocation11] sm:$0xff]
      %v145 = vld [vmem:[#allocation11 + $0x8] sm:$0xff]
      %v146 = vld [vmem:[#allocation11 + $0x10] sm:$0xff]
      %v147 = vld [vmem:[#allocation11 + $0x18] sm:$0xff]
      %v148 = vld [vmem:[#allocation11 + $0x20] sm:$0xff]
      %v149 = vld [vmem:[#allocation11 + $0x28] sm:$0xff]
      %v150 = vld [vmem:[#allocation11 + $0x30] sm:$0xff]
      %v151 = vld [vmem:[#allocation11 + $0x38] sm:$0xff]
      %v152 = vld [vmem:[#allocation11 + $0x40] sm:$0xff]
      %v153 = vld [vmem:[#allocation11 + $0x48] sm:$0xff]
      %v154 = vld [vmem:[#allocation11 + $0x50] sm:$0xff]
      %v155 = vld [vmem:[#allocation11 + $0x58] sm:$0xff]
      %v156 = vld [vmem:[#allocation11 + $0x60] sm:$0xff]
      %v157 = vld [vmem:[#allocation11 + $0x68] sm:$0xff]
      %v158 = vld [vmem:[#allocation11 + $0x70] sm:$0xff]
      %v159 = vld [vmem:[#allocation11 + $0x78] sm:$0xff]
      %v160 = vld [vmem:[#allocation12] sm:$0xff]
      %v161 = vld [vmem:[#allocation12 + $0x8] sm:$0xff]
      %v162 = vld [vmem:[#allocation12 + $0x10] sm:$0xff]
      %v163 = vld [vmem:[#allocation12 + $0x18] sm:$0xff]
      %v164 = vld [vmem:[#allocation12 + $0x20] sm:$0xff]
      %v165 = vld [vmem:[#allocation12 + $0x28] sm:$0xff]
      %v166 = vld [vmem:[#allocation12 + $0x30] sm:$0xff]
      %v167 = vld [vmem:[#allocation12 + $0x38] sm:$0xff]
      %v168 = vld [vmem:[#allocation12 + $0x40] sm:$0xff]
      %v169 = vld [vmem:[#allocation12 + $0x48] sm:$0xff]
      %v170 = vld [vmem:[#allocation12 + $0x50] sm:$0xff]
      %v171 = vld [vmem:[#allocation12 + $0x58] sm:$0xff]
      %v172 = vld [vmem:[#allocation12 + $0x60] sm:$0xff]
      %v173 = vld [vmem:[#allocation12 + $0x68] sm:$0xff]
      %v174 = vld [vmem:[#allocation12 + $0x70] sm:$0xff]
      %v175 = vld [vmem:[#allocation12 + $0x78] sm:$0xff]
      %vm176 = vcmask 523264
      %v178 = vsel %vm176, %v142, 0
      %180 = vmatprep.subr.mxu0 0.0
      %181 = vmatpush1.msra.mxu0 0.0
      %182 = vmatprep.subr.mxu0 0.0
      %183 = vmatpush1.msra.mxu0 0.0
      %184 = vmatprep.subr.mxu0 0.0
      %185 = vmatpush1.msra.mxu0 0.0
      %186 = vmatprep.subr.mxu0 0.0
      %187 = vmatpush1.msra.mxu0 0.0
      %188 = vmatprep.subr.mxu0 0.0
      %189 = vmatpush1.msra.mxu0 0.0
      %190 = vmatprep.subr.mxu0 0.0
      %191 = vmatpush1.msra.mxu0 0.0
      %192 = vmatprep.subr.mxu0 0.0
      %193 = vmatpush1.msra.mxu0 0.0
      %194 = vmatprep.subr.mxu0 0.0
      %195 = vmatpush1.msra.mxu0 0.0
      %196 = vmatprep.subr.mxu0 %v175
      %197 = vmatpush1.msra.mxu0 %v174
      %198 = vmatprep.subr.mxu0 %v173
      %199 = vmatpush1.msra.mxu0 %v172
      %200 = vmatprep.subr.mxu0 %v171
      %201 = vmatpush1.msra.mxu0 %v170
      %202 = vmatprep.subr.mxu0 %v169
      %203 = vmatpush1.msra.mxu0 %v168
      %204 = vmatprep.subr.mxu0 %v167
      %205 = vmatpush1.msra.mxu0 %v166
      %206 = vmatprep.subr.mxu0 %v165
      %207 = vmatpush1.msra.mxu0 %v164
      %208 = vmatprep.subr.mxu0 %v163
      %209 = vmatpush1.msra.mxu0 %v162
      %210 = vmatprep.subr.mxu0 %v161
      %211 = vmatpush1.msra.mxu0 %v160
      %212 = vmatprep.subr.mxu0 0.0
      %213 = vmatpush2.msra.mxu0 0.0
      %214 = vmatprep.subr.mxu0 0.0
      %215 = vmatpush2.msra.mxu0 0.0
      %216 = vmatprep.subr.mxu0 0.0
      %217 = vmatpush2.msra.mxu0 0.0
      %218 = vmatprep.subr.mxu0 0.0
      %219 = vmatpush2.msra.mxu0 0.0
      %220 = vmatprep.subr.mxu0 0.0
      %221 = vmatpush2.msra.mxu0 0.0
      %222 = vmatprep.subr.mxu0 0.0
      %223 = vmatpush2.msra.mxu0 0.0
      %224 = vmatprep.subr.mxu0 0.0
      %225 = vmatpush2.msra.mxu0 0.0
      %226 = vmatprep.subr.mxu0 0.0
      %227 = vmatpush2.msra.mxu0 0.0
      %228 = vmatprep.subr.mxu0 0.0
      %229 = vmatpush2.msra.mxu0 0.0
      %230 = vmatprep.subr.mxu0 0.0
      %231 = vmatpush2.msra.mxu0 0.0
      %232 = vmatprep.subr.mxu0 0.0
      %233 = vmatpush2.msra.mxu0 0.0
      %234 = vmatprep.subr.mxu0 0.0
      %235 = vmatpush2.msra.mxu0 0.0
      %236 = vmatprep.subr.mxu0 0.0
      %237 = vmatpush2.msra.mxu0 0.0
      %238 = vmatprep.subr.mxu0 0.0
      %239 = vmatpush2.msra.mxu0 0.0
      %240 = vmatprep.subr.mxu0 0.0
      %241 = vmatpush2.msra.mxu0 0.0
      %242 = vmatprep.subr.mxu0 0.0
      %243 = vmatpush2.msra.mxu0 0.0
      %244 = vmatprep.mubr.f32.mxu0 0.0
      %245 = vmatmul.mubr.f32.gmra.mxu0 %v178
      %v246 = vpop.f32.mrf.mxu0
      %v247 = vadd.f32 0.0, %v246
      %v248 = vpop.f32.mrf.mxu0
      %v249 = vadd.f32 0.0, %v248
      %250 = vdwg.mxu0
      %v252 = vsel %vm176, %v140, 0
      %254 = vmatprep.subr.mxu0 0.0
      %255 = vmatpush1.msra.mxu0 0.0
      %256 = vmatprep.subr.mxu0 0.0
      %257 = vmatpush1.msra.mxu0 0.0
      %258 = vmatprep.subr.mxu0 0.0
      %259 = vmatpush1.msra.mxu0 0.0
      %260 = vmatprep.subr.mxu0 0.0
      %261 = vmatpush1.msra.mxu0 0.0
      %262 = vmatprep.subr.mxu0 0.0
      %263 = vmatpush1.msra.mxu0 0.0
      %264 = vmatprep.subr.mxu0 0.0
      %265 = vmatpush1.msra.mxu0 0.0
      %266 = vmatprep.subr.mxu0 0.0
      %267 = vmatpush1.msra.mxu0 0.0
      %268 = vmatprep.subr.mxu0 0.0
      %269 = vmatpush1.msra.mxu0 0.0
      %270 = vmatprep.subr.mxu0 %v159
      %271 = vmatpush1.msra.mxu0 %v158
      %272 = vmatprep.subr.mxu0 %v157
      %273 = vmatpush1.msra.mxu0 %v156
      %274 = vmatprep.subr.mxu0 %v155
      %275 = vmatpush1.msra.mxu0 %v154
      %276 = vmatprep.subr.mxu0 %v153
      %277 = vmatpush1.msra.mxu0 %v152
      %278 = vmatprep.subr.mxu0 %v151
      %279 = vmatpush1.msra.mxu0 %v150
      %280 = vmatprep.subr.mxu0 %v149
      %281 = vmatpush1.msra.mxu0 %v148
      %282 = vmatprep.subr.mxu0 %v147
      %283 = vmatpush1.msra.mxu0 %v146
      %284 = vmatprep.subr.mxu0 %v145
      %285 = vmatpush1.msra.mxu0 %v144
      %286 = vmatprep.subr.mxu0 0.0
      %287 = vmatpush2.msra.mxu0 0.0
      %288 = vmatprep.subr.mxu0 0.0
      %289 = vmatpush2.msra.mxu0 0.0
      %290 = vmatprep.subr.mxu0 0.0
      %291 = vmatpush2.msra.mxu0 0.0
      %292 = vmatprep.subr.mxu0 0.0
      %293 = vmatpush2.msra.mxu0 0.0
      %294 = vmatprep.subr.mxu0 0.0
      %295 = vmatpush2.msra.mxu0 0.0
      %296 = vmatprep.subr.mxu0 0.0
      %297 = vmatpush2.msra.mxu0 0.0
      %298 = vmatprep.subr.mxu0 0.0
      %299 = vmatpush2.msra.mxu0 0.0
      %300 = vmatprep.subr.mxu0 0.0
      %301 = vmatpush2.msra.mxu0 0.0
      %302 = vmatprep.subr.mxu0 0.0
      %303 = vmatpush2.msra.mxu0 0.0
      %304 = vmatprep.subr.mxu0 0.0
      %305 = vmatpush2.msra.mxu0 0.0
      %306 = vmatprep.subr.mxu0 0.0
      %307 = vmatpush2.msra.mxu0 0.0
      %308 = vmatprep.subr.mxu0 0.0
      %309 = vmatpush2.msra.mxu0 0.0
      %310 = vmatprep.subr.mxu0 0.0
      %311 = vmatpush2.msra.mxu0 0.0
      %312 = vmatprep.subr.mxu0 0.0
      %313 = vmatpush2.msra.mxu0 0.0
      %314 = vmatprep.subr.mxu0 0.0
      %315 = vmatpush2.msra.mxu0 0.0
      %316 = vmatprep.subr.mxu0 0.0
      %317 = vmatpush2.msra.mxu0 0.0
      %318 = vmatprep.mubr.f32.mxu0 0.0
      %319 = vmatmul.mubr.f32.gmra.mxu0 %v252
      %v320 = vpop.f32.mrf.mxu0
      %v321 = vadd.f32 %v247, %v320
      %v322 = vpop.f32.mrf.mxu0
      %v323 = vadd.f32 %v249, %v322
      %324 = vdwg.mxu0
      %v325 = vld [vmem:[%s4] sm:$0x3]
      %v327 = vlaneseq
      %v328 = vshrl.u32 %v327, 7
      %v329 = vsub.s32 0, %v328
      %v330 = vrot.slane %v325, %v329
      %v331 = vlaneseq
      %v332 = vshrl.u32 %v331, 7
      %v333 = vsub.s32 1, %v332
      %v334 = vrot.slane %v325, %v333
      %v337 = vadd.f32 %v321, %v330
      %v338 = vadd.f32 %v323, %v334
      %s339 = smul.u32 %s135, 2
      %s340 = smul.addr %s339, 2
      %s341 = scalar_lea.vmem [#allocation6], %s340
      %v342 = vld [vmem:[%s341] sm:$0xf]
      %v343 = vld [vmem:[#allocation9] sm:$0xff]
      %v344 = vld [vmem:[#allocation9 + $0x8] sm:$0xff]
      %v345 = vld [vmem:[#allocation9 + $0x10] sm:$0xff]
      %v346 = vld [vmem:[#allocation9 + $0x18] sm:$0xff]
      %v347 = vld [vmem:[#allocation9 + $0x20] sm:$0xff]
      %v348 = vld [vmem:[#allocation9 + $0x28] sm:$0xff]
      %v349 = vld [vmem:[#allocation9 + $0x30] sm:$0xff]
      %v350 = vld [vmem:[#allocation9 + $0x38] sm:$0xff]
      %v351 = vld [vmem:[#allocation9 + $0x40] sm:$0xff]
      %v352 = vld [vmem:[#allocation9 + $0x48] sm:$0xff]
      %v353 = vld [vmem:[#allocation9 + $0x50] sm:$0xff]
      %v354 = vld [vmem:[#allocation9 + $0x58] sm:$0xff]
      %v355 = vld [vmem:[#allocation9 + $0x60] sm:$0xff]
      %v356 = vld [vmem:[#allocation9 + $0x68] sm:$0xff]
      %v357 = vld [vmem:[#allocation9 + $0x70] sm:$0xff]
      %v358 = vld [vmem:[#allocation9 + $0x78] sm:$0xff]
      %359 = vmatprep.subr.mxu0 0.0
      %360 = vmatpush1.msra.mxu0 0.0
      %361 = vmatprep.subr.mxu0 0.0
      %362 = vmatpush1.msra.mxu0 0.0
      %363 = vmatprep.subr.mxu0 0.0
      %364 = vmatpush1.msra.mxu0 0.0
      %365 = vmatprep.subr.mxu0 0.0
      %366 = vmatpush1.msra.mxu0 0.0
      %367 = vmatprep.subr.mxu0 0.0
      %368 = vmatpush1.msra.mxu0 0.0
      %369 = vmatprep.subr.mxu0 0.0
      %370 = vmatpush1.msra.mxu0 0.0
      %371 = vmatprep.subr.mxu0 0.0
      %372 = vmatpush1.msra.mxu0 0.0
      %373 = vmatprep.subr.mxu0 0.0
      %374 = vmatpush1.msra.mxu0 0.0
      %375 = vmatprep.subr.mxu0 %v358
      %376 = vmatpush1.msra.mxu0 %v357
      %377 = vmatprep.subr.mxu0 %v356
      %378 = vmatpush1.msra.mxu0 %v355
      %379 = vmatprep.subr.mxu0 %v354
      %380 = vmatpush1.msra.mxu0 %v353
      %381 = vmatprep.subr.mxu0 %v352
      %382 = vmatpush1.msra.mxu0 %v351
      %383 = vmatprep.subr.mxu0 %v350
      %384 = vmatpush1.msra.mxu0 %v349
      %385 = vmatprep.subr.mxu0 %v348
      %386 = vmatpush1.msra.mxu0 %v347
      %387 = vmatprep.subr.mxu0 %v346
      %388 = vmatpush1.msra.mxu0 %v345
      %389 = vmatprep.subr.mxu0 %v344
      %390 = vmatpush1.msra.mxu0 %v343
      %391 = vmatprep.subr.mxu0 0.0
      %392 = vmatpush2.msra.mxu0 0.0
      %393 = vmatprep.subr.mxu0 0.0
      %394 = vmatpush2.msra.mxu0 0.0
      %395 = vmatprep.subr.mxu0 0.0
      %396 = vmatpush2.msra.mxu0 0.0
      %397 = vmatprep.subr.mxu0 0.0
      %398 = vmatpush2.msra.mxu0 0.0
      %399 = vmatprep.subr.mxu0 0.0
      %400 = vmatpush2.msra.mxu0 0.0
      %401 = vmatprep.subr.mxu0 0.0
      %402 = vmatpush2.msra.mxu0 0.0
      %403 = vmatprep.subr.mxu0 0.0
      %404 = vmatpush2.msra.mxu0 0.0
      %405 = vmatprep.subr.mxu0 0.0
      %406 = vmatpush2.msra.mxu0 0.0
      %407 = vmatprep.subr.mxu0 0.0
      %408 = vmatpush2.msra.mxu0 0.0
      %409 = vmatprep.subr.mxu0 0.0
      %410 = vmatpush2.msra.mxu0 0.0
      %411 = vmatprep.subr.mxu0 0.0
      %412 = vmatpush2.msra.mxu0 0.0
      %413 = vmatprep.subr.mxu0 0.0
      %414 = vmatpush2.msra.mxu0 0.0
      %415 = vmatprep.subr.mxu0 0.0
      %416 = vmatpush2.msra.mxu0 0.0
      %417 = vmatprep.subr.mxu0 0.0
      %418 = vmatpush2.msra.mxu0 0.0
      %419 = vmatprep.subr.mxu0 0.0
      %420 = vmatpush2.msra.mxu0 0.0
      %421 = vmatprep.subr.mxu0 0.0
      %422 = vmatpush2.msra.mxu0 0.0
      %423 = vmatprep.mubr.f32.mxu0 0.0
      %424 = vmatmul.mubr.f32.gmra.mxu0 %v252
      %v425 = vpop.f32.mrf.mxu0
      %v426 = vadd.f32 0.0, %v425
      %v427 = vpop.f32.mrf.mxu0
      %v428 = vadd.f32 0.0, %v427
      %429 = vdwg.mxu0
      %v432 = vcombine.low %v426, %v428
      %v434 = vunpack.c.l.s4 1983009808
      %v435 = vunpack.c.0.s8 %v434
      %v436 = vlaneseq
      %v437 = vshrl.u32 %v436, 7
      %v438 = vsub.s32 %v435, %v437
      %v439 = vrot.slane %v432, %v438
      %v441 = vadd.f32 %v342, %v439
      %v442 = vxor.u32 %v337, 2147483648
      %v443 = vxor.u32 %v338, 2147483648
      %v444 = vmul.f32 %v442, 1.442695
      %v445 = vpow.pop %v444
      %v446 = vmul.f32 %v443, 1.442695
      %v447 = vpow.pop %v446
      %v448 = vadd.f32 %v445, 1.0
      %v449 = vadd.f32 %v447, 1.0
      %v450 = vrcp.pop %v448
      %v451 = vmul.f32 1.0, %v450
      %v452 = vrcp.pop %v449
      %v453 = vmul.f32 1.0, %v452
      %v454 = vtanh.pop %v338
      %456 = vrot.lane.b32.xlu0 %v143, 64
      %v457 = vpop.permute.xlu0 %456
      %v459 = vmul.f32 %v451, %v457
      %461 = vrot.lane.b32.xlu0 %v454, 64
      %v462 = vpop.permute.xlu0 %461
      %v464 = vmul.f32 %v451, %v462
      %466 = vrot.lane.b32.xlu0 %v464, 64
      %v467 = vpop.permute.xlu0 %466
      %v469 = vadd.f32 %v459, %v467
      %v470 = vtanh.pop %v469
      %472 = vrot.lane.b32.xlu0 %v470, 64
      %v473 = vpop.permute.xlu0 %472
      %v475 = vmul.f32 %v453, %v473
      %v476 = vxor.u32 %v441, 2147483648
      %v477 = vmul.f32 %v476, 1.442695
      %v478 = vpow.pop %v477
      %v479 = vadd.f32 %v478, 1.0
      %v480 = vrcp.pop %v479
      %v481 = vmul.f32 1.0, %v480
      %483 = vrot.lane.b32.xlu0 %v441, 64
      %v484 = vpop.permute.xlu0 %483
      %v485 = vrot.slane %v484, 2
      %v487 = vtanh.pop %v485
      %v490 = vunpack.c.l.s4 1983009808
      %v491 = vunpack.c.0.s8 %v490
      %v492 = vlaneseq
      %v493 = vshrl.u32 %v492, 7
      %v494 = vsub.s32 %v491, %v493
      %v495 = vrot.slane %v141, %v494
      %496 = vrot.lane.b32.xlu0 %v495, 64
      %v497 = vpop.permute.xlu0 %496
      %v499 = vmul.f32 %v481, %v497
      %v500 = vmul.f32 %v481, %v487
      %502 = vrot.lane.b32.xlu0 %v500, 64
      %v503 = vpop.permute.xlu0 %502
      %v505 = vadd.f32 %v499, %v503
      %v506 = vtanh.pop %v505
      %v508 = vrot.slane %v481, 2
      %511 = vrot.lane.b32.xlu0 %v506, 64
      %v512 = vpop.permute.xlu0 %511
      %v514 = vmul.f32 %v508, %v512
      %v517 = vunpack.c.l.s4 1983009808
      %v518 = vunpack.c.0.s8 %v517
      %v519 = vlaneseq
      %v520 = vshrl.u32 %v519, 7
      %v521 = vsub.s32 %v518, %v520
      %v522 = vrot.slane %v505, %v521
      %523 = vrot.lane.b32.xlu0 %v522, 64
      %v524 = vpop.permute.xlu0 %523
      %527 = vrot.lane.b32.xlu0 %v469, 64
      %v528 = vpop.permute.xlu0 %527
    $region46: #{tpu_custom_call.1} parent=1 // loop_footer
      %s137 = sadd.s32 %s135, 1
    $region47: #{tpu_custom_call.1} parent=1 // loop_footer_branch
      %134 = sbr.rel target = $region43
    $region48: #{tpu_custom_call.1} parent=1 // loop_exit
      _
    %vm530 = vcmask 517120
    %531 = vst.msk [vmem:[#allocation2] sm:$0x3] %vm530, %v140
    %532 = vst.msk [vmem:[#allocation3] sm:$0x3] %vm530, %v141
    %533 = vst.msk [vmem:[#allocation4] sm:$0x3] %vm530, %v142
    %534 = vst.msk [vmem:[#allocation5] sm:$0x3] %vm530, %v143
    // Predicated region
    $region49: #{tpu_custom_call.1} parent=1 // pred_check
      %p535 = pneg %p77
    $region50: #{tpu_custom_call.1} parent=1 // pred_check_branch
      %537 = sbr.rel (%p535) target = $region52
    $region51: #{tpu_custom_call.1} parent=1 // pred_region
      %v538 = vld [vmem:[#allocation2] sm:$0x3]
      %v539 = vld [vmem:[#allocation11] sm:$0xff]
      %v540 = vld [vmem:[#allocation11 + $0x8] sm:$0xff]
      %v541 = vld [vmem:[#allocation11 + $0x10] sm:$0xff]
      %v542 = vld [vmem:[#allocation11 + $0x18] sm:$0xff]
      %v543 = vld [vmem:[#allocation11 + $0x20] sm:$0xff]
      %v544 = vld [vmem:[#allocation11 + $0x28] sm:$0xff]
      %v545 = vld [vmem:[#allocation11 + $0x30] sm:$0xff]
      %v546 = vld [vmem:[#allocation11 + $0x38] sm:$0xff]
      %v547 = vld [vmem:[#allocation11 + $0x40] sm:$0xff]
      %v548 = vld [vmem:[#allocation11 + $0x48] sm:$0xff]
      %v549 = vld [vmem:[#allocation11 + $0x50] sm:$0xff]
      %v550 = vld [vmem:[#allocation11 + $0x58] sm:$0xff]
      %v551 = vld [vmem:[#allocation11 + $0x60] sm:$0xff]
      %v552 = vld [vmem:[#allocation11 + $0x68] sm:$0xff]
      %v553 = vld [vmem:[#allocation11 + $0x70] sm:$0xff]
      %v554 = vld [vmem:[#allocation11 + $0x78] sm:$0xff]
      %v555 = vld [vmem:[#allocation4] sm:$0x3]
      %v556 = vld [vmem:[#allocation12] sm:$0xff]
      %v557 = vld [vmem:[#allocation12 + $0x8] sm:$0xff]
      %v558 = vld [vmem:[#allocation12 + $0x10] sm:$0xff]
      %v559 = vld [vmem:[#allocation12 + $0x18] sm:$0xff]
      %v560 = vld [vmem:[#allocation12 + $0x20] sm:$0xff]
      %v561 = vld [vmem:[#allocation12 + $0x28] sm:$0xff]
      %v562 = vld [vmem:[#allocation12 + $0x30] sm:$0xff]
      %v563 = vld [vmem:[#allocation12 + $0x38] sm:$0xff]
      %v564 = vld [vmem:[#allocation12 + $0x40] sm:$0xff]
      %v565 = vld [vmem:[#allocation12 + $0x48] sm:$0xff]
      %v566 = vld [vmem:[#allocation12 + $0x50] sm:$0xff]
      %v567 = vld [vmem:[#allocation12 + $0x58] sm:$0xff]
      %v568 = vld [vmem:[#allocation12 + $0x60] sm:$0xff]
      %v569 = vld [vmem:[#allocation12 + $0x68] sm:$0xff]
      %v570 = vld [vmem:[#allocation12 + $0x70] sm:$0xff]
      %v571 = vld [vmem:[#allocation12 + $0x78] sm:$0xff]
      %vm572 = vcmask 523264
      %v574 = vsel %vm572, %v555, 0
      %576 = vmatprep.subr.mxu0 0.0
      %577 = vmatpush1.msra.mxu0 0.0
      %578 = vmatprep.subr.mxu0 0.0
      %579 = vmatpush1.msra.mxu0 0.0
      %580 = vmatprep.subr.mxu0 0.0
      %581 = vmatpush1.msra.mxu0 0.0
      %582 = vmatprep.subr.mxu0 0.0
      %583 = vmatpush1.msra.mxu0 0.0
      %584 = vmatprep.subr.mxu0 0.0
      %585 = vmatpush1.msra.mxu0 0.0
      %586 = vmatprep.subr.mxu0 0.0
      %587 = vmatpush1.msra.mxu0 0.0
      %588 = vmatprep.subr.mxu0 0.0
      %589 = vmatpush1.msra.mxu0 0.0
      %590 = vmatprep.subr.mxu0 0.0
      %591 = vmatpush1.msra.mxu0 0.0
      %592 = vmatprep.subr.mxu0 %v571
      %593 = vmatpush1.msra.mxu0 %v570
      %594 = vmatprep.subr.mxu0 %v569
      %595 = vmatpush1.msra.mxu0 %v568
      %596 = vmatprep.subr.mxu0 %v567
      %597 = vmatpush1.msra.mxu0 %v566
      %598 = vmatprep.subr.mxu0 %v565
      %599 = vmatpush1.msra.mxu0 %v564
      %600 = vmatprep.subr.mxu0 %v563
      %601 = vmatpush1.msra.mxu0 %v562
      %602 = vmatprep.subr.mxu0 %v561
      %603 = vmatpush1.msra.mxu0 %v560
      %604 = vmatprep.subr.mxu0 %v559
      %605 = vmatpush1.msra.mxu0 %v558
      %606 = vmatprep.subr.mxu0 %v557
      %607 = vmatpush1.msra.mxu0 %v556
      %608 = vmatprep.subr.mxu0 0.0
      %609 = vmatpush2.msra.mxu0 0.0
      %610 = vmatprep.subr.mxu0 0.0
      %611 = vmatpush2.msra.mxu0 0.0
      %612 = vmatprep.subr.mxu0 0.0
      %613 = vmatpush2.msra.mxu0 0.0
      %614 = vmatprep.subr.mxu0 0.0
      %615 = vmatpush2.msra.mxu0 0.0
      %616 = vmatprep.subr.mxu0 0.0
      %617 = vmatpush2.msra.mxu0 0.0
      %618 = vmatprep.subr.mxu0 0.0
      %619 = vmatpush2.msra.mxu0 0.0
      %620 = vmatprep.subr.mxu0 0.0
      %621 = vmatpush2.msra.mxu0 0.0
      %622 = vmatprep.subr.mxu0 0.0
      %623 = vmatpush2.msra.mxu0 0.0
      %624 = vmatprep.subr.mxu0 0.0
      %625 = vmatpush2.msra.mxu0 0.0
      %626 = vmatprep.subr.mxu0 0.0
      %627 = vmatpush2.msra.mxu0 0.0
      %628 = vmatprep.subr.mxu0 0.0
      %629 = vmatpush2.msra.mxu0 0.0
      %630 = vmatprep.subr.mxu0 0.0
      %631 = vmatpush2.msra.mxu0 0.0
      %632 = vmatprep.subr.mxu0 0.0
      %633 = vmatpush2.msra.mxu0 0.0
      %634 = vmatprep.subr.mxu0 0.0
      %635 = vmatpush2.msra.mxu0 0.0
      %636 = vmatprep.subr.mxu0 0.0
      %637 = vmatpush2.msra.mxu0 0.0
      %638 = vmatprep.subr.mxu0 0.0
      %639 = vmatpush2.msra.mxu0 0.0
      %640 = vmatprep.mubr.f32.mxu0 0.0
      %641 = vmatmul.mubr.f32.gmra.mxu0 %v574
      %v642 = vpop.f32.mrf.mxu0
      %v643 = vadd.f32 0.0, %v642
      %v644 = vpop.f32.mrf.mxu0
      %v645 = vadd.f32 0.0, %v644
      %646 = vdwg.mxu0
      %v648 = vsel %vm572, %v538, 0
      %650 = vmatprep.subr.mxu0 0.0
      %651 = vmatpush1.msra.mxu0 0.0
      %652 = vmatprep.subr.mxu0 0.0
      %653 = vmatpush1.msra.mxu0 0.0
      %654 = vmatprep.subr.mxu0 0.0
      %655 = vmatpush1.msra.mxu0 0.0
      %656 = vmatprep.subr.mxu0 0.0
      %657 = vmatpush1.msra.mxu0 0.0
      %658 = vmatprep.subr.mxu0 0.0
      %659 = vmatpush1.msra.mxu0 0.0
      %660 = vmatprep.subr.mxu0 0.0
      %661 = vmatpush1.msra.mxu0 0.0
      %662 = vmatprep.subr.mxu0 0.0
      %663 = vmatpush1.msra.mxu0 0.0
      %664 = vmatprep.subr.mxu0 0.0
      %665 = vmatpush1.msra.mxu0 0.0
      %666 = vmatprep.subr.mxu0 %v554
      %667 = vmatpush1.msra.mxu0 %v553
      %668 = vmatprep.subr.mxu0 %v552
      %669 = vmatpush1.msra.mxu0 %v551
      %670 = vmatprep.subr.mxu0 %v550
      %671 = vmatpush1.msra.mxu0 %v549
      %672 = vmatprep.subr.mxu0 %v548
      %673 = vmatpush1.msra.mxu0 %v547
      %674 = vmatprep.subr.mxu0 %v546
      %675 = vmatpush1.msra.mxu0 %v545
      %676 = vmatprep.subr.mxu0 %v544
      %677 = vmatpush1.msra.mxu0 %v543
      %678 = vmatprep.subr.mxu0 %v542
      %679 = vmatpush1.msra.mxu0 %v541
      %680 = vmatprep.subr.mxu0 %v540
      %681 = vmatpush1.msra.mxu0 %v539
      %682 = vmatprep.subr.mxu0 0.0
      %683 = vmatpush2.msra.mxu0 0.0
      %684 = vmatprep.subr.mxu0 0.0
      %685 = vmatpush2.msra.mxu0 0.0
      %686 = vmatprep.subr.mxu0 0.0
      %687 = vmatpush2.msra.mxu0 0.0
      %688 = vmatprep.subr.mxu0 0.0
      %689 = vmatpush2.msra.mxu0 0.0
      %690 = vmatprep.subr.mxu0 0.0
      %691 = vmatpush2.msra.mxu0 0.0
      %692 = vmatprep.subr.mxu0 0.0
      %693 = vmatpush2.msra.mxu0 0.0
      %694 = vmatprep.subr.mxu0 0.0
      %695 = vmatpush2.msra.mxu0 0.0
      %696 = vmatprep.subr.mxu0 0.0
      %697 = vmatpush2.msra.mxu0 0.0
      %698 = vmatprep.subr.mxu0 0.0
      %699 = vmatpush2.msra.mxu0 0.0
      %700 = vmatprep.subr.mxu0 0.0
      %701 = vmatpush2.msra.mxu0 0.0
      %702 = vmatprep.subr.mxu0 0.0
      %703 = vmatpush2.msra.mxu0 0.0
      %704 = vmatprep.subr.mxu0 0.0
      %705 = vmatpush2.msra.mxu0 0.0
      %706 = vmatprep.subr.mxu0 0.0
      %707 = vmatpush2.msra.mxu0 0.0
      %708 = vmatprep.subr.mxu0 0.0
      %709 = vmatpush2.msra.mxu0 0.0
      %710 = vmatprep.subr.mxu0 0.0
      %711 = vmatpush2.msra.mxu0 0.0
      %712 = vmatprep.subr.mxu0 0.0
      %713 = vmatpush2.msra.mxu0 0.0
      %714 = vmatprep.mubr.f32.mxu0 0.0
      %715 = vmatmul.mubr.f32.gmra.mxu0 %v648
      %v716 = vpop.f32.mrf.mxu0
      %v717 = vadd.f32 %v643, %v716
      %v718 = vpop.f32.mrf.mxu0
      %v719 = vadd.f32 %v645, %v718
      %720 = vdwg.mxu0
      %v721 = vld [vmem:[%s4] sm:$0x3]
      %v723 = vlaneseq
      %v724 = vshrl.u32 %v723, 7
      %v725 = vsub.s32 0, %v724
      %v726 = vrot.slane %v721, %v725
      %v727 = vlaneseq
      %v728 = vshrl.u32 %v727, 7
      %v729 = vsub.s32 1, %v728
      %v730 = vrot.slane %v721, %v729
      %v733 = vadd.f32 %v717, %v726
      %v734 = vadd.f32 %v719, %v730
      %v735 = vld [vmem:[#allocation5] sm:$0x3]
      %v736 = vxor.u32 %v733, 2147483648
      %v737 = vxor.u32 %v734, 2147483648
      %v738 = vmul.f32 %v736, 1.442695
      %v739 = vpow.pop %v738
      %v740 = vmul.f32 %v737, 1.442695
      %v741 = vpow.pop %v740
      %v742 = vadd.f32 %v739, 1.0
      %v743 = vadd.f32 %v741, 1.0
      %v744 = vrcp.pop %v742
      %v745 = vmul.f32 1.0, %v744
      %v746 = vrcp.pop %v743
      %v747 = vmul.f32 1.0, %v746
      %v748 = vtanh.pop %v734
      %750 = vrot.lane.b32.xlu0 %v735, 64
      %v751 = vpop.permute.xlu0 %750
      %v753 = vmul.f32 %v745, %v751
      %755 = vrot.lane.b32.xlu0 %v748, 64
      %v756 = vpop.permute.xlu0 %755
      %v758 = vmul.f32 %v745, %v756
      %760 = vrot.lane.b32.xlu0 %v758, 64
      %v761 = vpop.permute.xlu0 %760
      %v763 = vadd.f32 %v753, %v761
      %v764 = vtanh.pop %v763
      %766 = vrot.lane.b32.xlu0 %v764, 64
      %v767 = vpop.permute.xlu0 %766
      %v769 = vmul.f32 %v747, %v767
      %770 = vst.msk [vmem:[#allocation14] sm:$0x3] %vm530, %v769
    $region52: #{tpu_custom_call.1} parent=1 // pred_fallthru
      _
    // Predicated region
    $region53: #{tpu_custom_call.1} parent=1 // pred_check
      _
    $region54: #{tpu_custom_call.1} parent=1 // pred_check_branch
      %772 = sbr.rel (0) target = $region56
    $region55: #{tpu_custom_call.1} parent=1 // pred_region
      %s774 = ssub.s32 32, 32
      %775 = vsyncadd [#allocation8], %s774
      %s777 = sshll.u32 [#allocation14], 4
      %s778 = int_to_ptr.vmem [resolvable:$true] %s777
      %780 = dma.vmem_to_hbm [thread:$0]  %s778, 32, %s5, [#allocation8]
    $region56: #{tpu_custom_call.1} parent=1 // pred_fallthru
      _
    // Predicated region
    $region57: #{tpu_custom_call.1} parent=1 // pred_check
      _
    $region58: #{tpu_custom_call.1} parent=1 // pred_check_branch
      %782 = sbr.rel (0) target = $region60
    $region59: #{tpu_custom_call.1} parent=1 // pred_region
      %783 = dma.done [#allocation8], 32
    $region60: #{tpu_custom_call.1} parent=1 // pred_fallthru
      _
    %784 = vsyncpa [#allocation7], 1
    %785 = vsyncpa [#allocation10], 1
    %786 = vsyncpa [#allocation13], 1
    %787 = vsyncpa [#allocation8], 1

</llo_original>
